<compile_context>
chip_gen: v7x
topology: tpu7x:2x2x1
jax: 0.10.0
libtpu: 0.0.40
codegen_flags: <defaults>
</compile_context>

<pallas_src>
import jax
import jax.numpy as jnp
from jax.experimental import pallas as pl
from jax.experimental.pallas import tpu as pltpu


def _silu_kernel(x_ref, o_ref):
    xf = x_ref[...].astype(jnp.float32)
    # exp / reciprocal go to the EUP slot; VALU and the DMA engines stay free.
    o_ref[...] = (xf * jax.nn.sigmoid(xf)).astype(o_ref.dtype)


_LANE = 128
_W_CANDIDATES = (8192, 4096, 2048, 1024, 512, 256, _LANE)
_DEFAULT_BLOCK_BYTES = 3 * 1024 * 1024      # safe per-buffer size on v5e/v6e/v7x
_MIN_BLOCK_BYTES = 1 * 1024 * 1024          # never shrink blocks below ~1 MiB
_MANY_STEP_THRESHOLD_BYTES = 8 * 1024 * 1024
_VMEM_LIMIT_BYTES = 32 * 1024 * 1024        # < physical VMEM on every generation


def _round_up(n, m):
    return ((n + m - 1) // m) * m


def _round_down(n, m):
    return (n // m) * m


def silu(x, *, target_block_bytes=_DEFAULT_BLOCK_BYTES, donate_input=False):
    """SiLU over an arbitrarily-shaped array (NCHW conv activations in EIMN).

    Set donate_input=True only when the caller donates x's buffer (e.g. via
    jax.jit donate_argnums); otherwise XLA would insert a protective copy.
    """
    orig_shape = x.shape
    dtype = x.dtype
    itemsize = jnp.dtype(dtype).itemsize
    total = int(x.size)
    if total == 0:
        return x
    total_bytes = total * itemsize
    # minimum sublane multiple for the packed dtype: f32 -> 8, bf16 -> 16, i8 -> 32
    min_sub = max(8, 32 // itemsize)

    # ---- fast path: lane-dense 2D slab (rows, W), free reshape, no padding ----
    W = next((c for c in _W_CANDIDATES if total % c == 0), None)

    if W is not None:
        rows = total // W
        arr = x.reshape(rows, W)
        row_bytes = W * itemsize
        tr = max(min_sub, _round_down(target_block_bytes // row_bytes, min_sub))
        if rows <= tr:
            tr = rows  # single full-extent block along rows — always layout-legal
        elif total_bytes >= _MANY_STEP_THRESHOLD_BYTES and pl.cdiv(rows, tr) < 8:
            # >= 8 grid steps (>= 4 per v7x core) while keeping >= ~1 MiB blocks
            tr_steps = max(min_sub, _round_down(rows // 8, min_sub))
            tr_floor = _round_up(max(1, _MIN_BLOCK_BYTES // row_bytes), min_sub)
            tr = min(rows, max(tr_floor, min(tr, tr_steps)))
        block = (tr, W)
        grid = (pl.cdiv(rows, tr),)
        index_map = lambda i: (i, 0)
    else:
        # ---- unaligned total: tile the original trailing dims (no pad/slice) ----
        # Block last-two dims equal the full array dims, which satisfies the
        # (8,128) rule for any shape; the leading dim is tiled freely.
        if x.ndim >= 2:
            a, b = orig_shape[-2], orig_shape[-1]
            lead = total // (a * b)
        else:
            a, b = 1, total
            lead = 1
        arr = x.reshape(lead, a, b)
        row_bytes = max(1, a * b * itemsize)
        tr = max(1, min(lead, target_block_bytes // row_bytes))
        if total_bytes >= _MANY_STEP_THRESHOLD_BYTES and pl.cdiv(lead, tr) < 8:
            tr = max(1, min(lead, max(_MIN_BLOCK_BYTES // row_bytes, lead // 8)))
        block = (tr, a, b)
        grid = (pl.cdiv(lead, tr),)
        index_map = lambda i: (i, 0, 0)

    out = pl.pallas_call(
        _silu_kernel,
        out_shape=jax.ShapeDtypeStruct(arr.shape, dtype),
        grid_spec=pltpu.PrefetchScalarGridSpec(
            num_scalar_prefetch=0,
            grid=grid,
            in_specs=[pl.BlockSpec(block, index_map)],
            out_specs=pl.BlockSpec(block, index_map),
        ),
        input_output_aliases=({0: 0} if donate_input else {}),
        cost_estimate=pl.CostEstimate(
            flops=3 * total,
            transcendentals=total,
            bytes_accessed=2 * total_bytes,
        ),
        compiler_params=pltpu.CompilerParams(
            dimension_semantics=("parallel",),
            vmem_limit_bytes=_VMEM_LIMIT_BYTES,
        ),
    )(arr)

    return out.reshape(orig_shape)


def _ref_silu(x):
    return x * jax.nn.sigmoid(x)


if __name__ == "__main__":
    key = jax.random.PRNGKey(0)

    # Main check: NCHW f32, same convention as the PyTorch module.
    x = jax.random.normal(key, (2, 4, 16, 16), dtype=jnp.float32)
    y = jax.block_until_ready(silu(x))
    assert y.shape == x.shape and y.dtype == x.dtype
    assert jnp.allclose(y, _ref_silu(x), atol=1e-5, rtol=1e-5)

    # bf16 I/O path (halved HBM bytes, f32 in-register compute).
    xb = x.astype(jnp.bfloat16)
    yb = jax.block_until_ready(silu(xb))
    assert yb.shape == xb.shape and yb.dtype == xb.dtype
    assert jnp.allclose(
        yb.astype(jnp.float32), _ref_silu(xb).astype(jnp.float32),
        atol=1e-2, rtol=1e-2,
    )

    # Unaligned shape -> shape-preserving fallback (no pad / slice HBM copies).
    xo = jax.random.normal(jax.random.PRNGKey(1), (3, 5, 7, 9), dtype=jnp.float32)
    yo = jax.block_until_ready(silu(xo))
    assert yo.shape == xo.shape and yo.dtype == xo.dtype
    assert jnp.allclose(yo, _ref_silu(xo), atol=1e-5, rtol=1e-5)

    # Multi-step grid with a partial (masked) last block: rows=39, tr=8 -> grid (5,).
    xp = jax.random.normal(jax.random.PRNGKey(2), (13, 3, 8, 128), dtype=jnp.float32)
    yp = jax.block_until_ready(silu(xp, target_block_bytes=32 * 1024))
    assert yp.shape == xp.shape and yp.dtype == xp.dtype
    assert jnp.allclose(yp, _ref_silu(xp), atol=1e-5, rtol=1e-5)

    print("KERNEL_OK")
</pallas_src>

<mosaic_0001>
module attributes {stable_mosaic.version = 11 : i64} {
  func.func @_silu_kernel(%arg0: i32, %arg1: memref<1x2048xf32, #tpu.memory_space<vmem>>, %arg2: memref<1x2048xf32, #tpu.memory_space<vmem>>) attributes {dimension_semantics = [#tpu.dimension_semantics<parallel>], iteration_bounds = array<i64: 1>, scalar_prefetch = 0 : i64, scratch_operands = 0 : i64, tpu.core_type = #tpu.core_type<tc>, window_params = [{transform_indices = @transform_0, window_bounds = array<i64: 1, 2048>}, {transform_indices = @transform_1, window_bounds = array<i64: 1, 2048>}]} {
    %c0 = arith.constant 0 : index
    %c0_0 = arith.constant 0 : index
    %0 = vector.load %arg1[%c0, %c0_0] : memref<1x2048xf32, #tpu.memory_space<vmem>>, vector<1x2048xf32>
    %1 = arith.negf %0 : vector<1x2048xf32>
    %2 = math.exp %1 : vector<1x2048xf32>
    %cst = arith.constant 1.000000e+00 : f32
    %3 = vector.broadcast %cst : f32 to vector<1x2048xf32>
    %4 = arith.addf %3, %2 : vector<1x2048xf32>
    %5 = arith.divf %3, %4 : vector<1x2048xf32>
    %6 = arith.mulf %0, %5 : vector<1x2048xf32>
    %c0_1 = arith.constant 0 : index
    %c0_2 = arith.constant 0 : index
    %7 = vector.load %arg2[%c0_1, %c0_2] : memref<1x2048xf32, #tpu.memory_space<vmem>>, vector<1x2048xf32>
    tpu.vector_store %arg2[%c0_1, %c0_2], %6 {strides = array<i32>} : memref<1x2048xf32, #tpu.memory_space<vmem>>, vector<1x2048xf32>,
    return
  }
  func.func @transform_0(%arg0: i32) -> (i32, i32) {
    %c0_i32 = arith.constant 0 : i32
    %c0_i32_0 = arith.constant 0 : i32
    return %arg0, %c0_i32 : i32, i32
  }
  func.func @transform_1(%arg0: i32) -> (i32, i32) {
    %c0_i32 = arith.constant 0 : i32
    %c0_i32_0 = arith.constant 0 : i32
    return %arg0, %c0_i32 : i32, i32
  }
}

</mosaic_0001>

<llo_original>
// kernel: tpu_custom_call.1
$region0: #{tpu_custom_call.1}
  #allocation0 [shape = 'u32[]', space=smem, size = 0x4, offset = 0x4, fixed_abs, tag = 'smem constant byte address 0x4 - core index']
  #allocation1 [shape = 'u32[144,128]{1,0:T(1,128)}', space=vmem, size = 0x12000, scoped, tag = 'internal scratch']
  %s0 = inlined_call_operand.hbm [shape: f32[1,2048], index: 0, kind: input, shape index: {}]
  %s1 = inlined_call_operand.hbm [shape: f32[1,2048], index: 1, kind: output, shape index: {}]
  %s2 = sld [smem:[#allocation0]]
  $region18: #{tpu_custom_call.1} parent=0
    _
  %s4 = ssub.s32 1, %s2
  %s5 = scalar_select 0, %s4, %s2
  $region1: #{tpu_custom_call.1} parent=0
    #allocation2 [shape = 'u8[8192]{0}', space=vmem, size = 0x2000, scoped, tag = 'input window, operand 0, single buffered']
    #allocation3 [shape = 's32[1]{0}', space=sflag, size = 0x4, scoped, tag = 'scoped memory for tpu_custom_call.1']
    #allocation4 [shape = 's32[1]{0}', space=sflag, size = 0x4, scoped, tag = 'scoped memory for tpu_custom_call.1']
    #allocation5 [shape = 'u8[8192]{0}', space=vmem, size = 0x2000, scoped, tag = 'output window, operand 0, single buffered']
    %6 = vsyncpa [#allocation3], 0
    %7 = vsyncpa [#allocation4], 0
    // Predicated region
    $region2: #{tpu_custom_call.1} parent=1 // pred_check
      _
    $region3: #{tpu_custom_call.1} parent=1 // pred_check_branch
      %9 = sbr.rel (0) target = $region5
    $region4: #{tpu_custom_call.1} parent=1 // pred_region
      %s11 = ssub.s32 256, 256
      %12 = vsyncadd [#allocation3], %s11
      %s14 = sshll.u32 [#allocation2], 4
      %s15 = int_to_ptr.vmem [resolvable:$true] %s14
      %17 = dma.hbm_to_vmem [thread:$0]  %s0, 256, %s15, [#allocation3]
    $region5: #{tpu_custom_call.1} parent=1 // pred_fallthru
      _
    // Predicated region
    $region6: #{tpu_custom_call.1} parent=1 // pred_check
      _
    $region7: #{tpu_custom_call.1} parent=1 // pred_check_branch
      %19 = sbr.rel (0) target = $region9
    $region8: #{tpu_custom_call.1} parent=1 // pred_region
      %20 = dma.done [#allocation3], 256
    $region9: #{tpu_custom_call.1} parent=1 // pred_fallthru
      _
    %v21 = vld [vmem:[#allocation2] sm:$0xff]
    %v22 = vld [vmem:[#allocation2 + $0x8] sm:$0xff]
    %v23 = vxor.u32 %v21, 2147483648
    %v24 = vxor.u32 %v22, 2147483648
    %v25 = vmul.f32 %v23, 1.442695
    %v26 = vpow.pop %v25
    %v27 = vmul.f32 %v24, 1.442695
    %v28 = vpow.pop %v27
    %v29 = vadd.f32 %v26, 1.0
    %v30 = vadd.f32 %v28, 1.0
    %v31 = vrcp.pop %v29
    %v32 = vmul.f32 1.0, %v31
    %v33 = vrcp.pop %v30
    %v34 = vmul.f32 1.0, %v33
    %v35 = vmul.f32 %v21, %v32
    %v36 = vmul.f32 %v22, %v34
    %37 = vst [vmem:[#allocation5] sm:$0xff] %v35
    %38 = vst [vmem:[#allocation5 + $0x8] sm:$0xff] %v36
    // Predicated region
    $region10: #{tpu_custom_call.1} parent=1 // pred_check
      _
    $region11: #{tpu_custom_call.1} parent=1 // pred_check_branch
      %40 = sbr.rel (0) target = $region13
    $region12: #{tpu_custom_call.1} parent=1 // pred_region
      %s42 = ssub.s32 256, 256
      %43 = vsyncadd [#allocation4], %s42
      %s45 = sshll.u32 [#allocation5], 4
      %s46 = int_to_ptr.vmem [resolvable:$true] %s45
      %48 = dma.vmem_to_hbm [thread:$0]  %s46, 256, %s1, [#allocation4]
    $region13: #{tpu_custom_call.1} parent=1 // pred_fallthru
      _
    // Predicated region
    $region14: #{tpu_custom_call.1} parent=1 // pred_check
      _
    $region15: #{tpu_custom_call.1} parent=1 // pred_check_branch
      %50 = sbr.rel (0) target = $region17
    $region16: #{tpu_custom_call.1} parent=1 // pred_region
      %51 = dma.done [#allocation4], 256
    $region17: #{tpu_custom_call.1} parent=1 // pred_fallthru
      _
    %52 = vsyncpa [#allocation3], 1
    %53 = vsyncpa [#allocation4], 1

</llo_original>
